<compile_context>
chip_gen: v7x
topology: tpu7x:2x2x1
jax: 0.10.0
libtpu: 0.0.40
codegen_flags: <defaults>
</compile_context>

<pallas_src>
import functools

import numpy as np
import jax
import jax.numpy as jnp
from jax.experimental import pallas as pl
from jax.experimental.pallas import tpu as pltpu


def _round_up(x, m):
    return (x + m - 1) // m * m


def _cdiv(a, b):
    return (a + b - 1) // b


# ---------------------------------------------------------------------------
# Constant-kernel construction (mirrors Conv2dConstKernel.__init__)
# ---------------------------------------------------------------------------
def build_const_kernel_2d(kwidth, ksigma, undersampling):
    """Full 2-D constant kernel, identical to the PyTorch module (reference only)."""
    start = (-kwidth) // 2
    stop = kwidth // 2
    ax = np.linspace(start, stop, kwidth, dtype=np.float64)
    xx, yy = np.meshgrid(ax, ax, indexing="ij")
    k = np.exp(-(xx ** 2 + yy ** 2) / 2.0 / ksigma ** 2)
    k /= k.sum()
    p = undersampling // 2
    kp = np.pad(k, p)
    kout = kwidth + 2 * p - undersampling + 1
    out = np.zeros((kout, kout), np.float64)
    for i in range(kout):
        for j in range(kout):
            out[i, j] = kp[i:i + undersampling, j:j + undersampling].sum()
    return out.astype(np.float32)


@functools.lru_cache(maxsize=None)
def _const_kernel_1d(kwidth, ksigma, undersampling):
    """1-D factor w1 with kernel2d == outer(w1, w1): exact by construction
    (gauss2d = g (x) g, box = 1_U (x) 1_U)."""
    start = (-kwidth) // 2
    stop = kwidth // 2
    ax = np.linspace(start, stop, kwidth, dtype=np.float64)
    g = np.exp(-(ax ** 2) / 2.0 / ksigma ** 2)
    g /= g.sum()
    p = undersampling // 2
    gp = np.pad(g, p)
    kout = kwidth + 2 * p - undersampling + 1
    return np.array([gp[i:i + undersampling].sum() for i in range(kout)],
                    np.float64)


# ---------------------------------------------------------------------------
# Shift-invariant banded tap/downsample constants (cached, hi/lo bf16 split)
# ---------------------------------------------------------------------------
_BAND_CACHE = {}


def _band_constants(kwidth, ksigma, U, TH, TW, SH, SW):
    """M1[c, t] = w1[c - t*U]  -> (X_strip @ M1)[:, t] = sum_b w1[b] X[:, t*U + b]
       M2[t, r] = w1[r - t*U]  -> (M2 @ C)[t, :]      = sum_a w1[a] C[t*U + a, :]
    Returned as (hi, lo) bf16 pairs so every MXU matmul runs in plain bf16
    while the result keeps ~f32 accuracy (manual bf16x3)."""
    key = (int(kwidth), float(ksigma), int(U), TH, TW, SH, SW)
    if key not in _BAND_CACHE:
        w1 = _const_kernel_1d(int(kwidth), float(ksigma), int(U))
        K = w1.shape[0]
        m1 = np.zeros((SW, TW), np.float64)
        for t in range(TW):
            m1[t * U:t * U + K, t] = w1
        m2 = np.zeros((TH, SH), np.float64)
        for t in range(TH):
            m2[t, t * U:t * U + K] = w1

        def hi_lo(m):
            mf = jnp.asarray(m, dtype=jnp.float32)
            hi = mf.astype(jnp.bfloat16)
            lo = (mf - hi.astype(jnp.float32)).astype(jnp.bfloat16)
            return hi, lo

        _BAND_CACHE[key] = (*hi_lo(m1), *hi_lo(m2))
    return _BAND_CACHE[key]


# ---------------------------------------------------------------------------
# Pallas kernel: per output tile, fetch one input strip (manual double-buffered
# DMA) and compute Y_tile = M2_local @ (X_strip @ M1_local) in bf16x3 on the MXU.
# ---------------------------------------------------------------------------
def _make_kernel(n_wtiles, BH, BW, SH, SW):
    def kernel(x_hbm, m1h_ref, m1l_ref, m2h_ref, m2l_ref, o_ref, xbuf, sem):
        n = pl.program_id(0)
        i = pl.program_id(1)
        j = pl.program_id(2)
        slot = j & 1

        def start_fetch(jj, s):
            r0 = pl.multiple_of(i * BH, 8)
            c0 = pl.multiple_of(jj * BW, 128)
            pltpu.make_async_copy(
                x_hbm.at[n, pl.ds(r0, SH), pl.ds(c0, SW)],
                xbuf.at[s],
                sem.at[s],
            ).start()

        # Prime the double buffer at the first column tile of each (n, i).
        @pl.when(j == 0)
        def _():
            start_fetch(j, slot)

        # Prefetch the next column strip while computing the current one.
        @pl.when(j + 1 < n_wtiles)
        def _():
            start_fetch(j + 1, 1 - slot)

        # Wait for the current strip (descriptor reconstructed with same shape).
        pltpu.make_async_copy(
            x_hbm.at[n, pl.ds(0, SH), pl.ds(0, SW)],
            xbuf.at[slot],
            sem.at[slot],
        ).wait()

        xs = xbuf[slot]                                     # (SH, SW) f32
        x_hi = xs.astype(jnp.bfloat16)
        x_lo = (xs - x_hi.astype(jnp.float32)).astype(jnp.bfloat16)

        # Column taps + stride-U downsample (contract over the strip width).
        c = jnp.dot(x_hi, m1h_ref[...], preferred_element_type=jnp.float32)
        c += jnp.dot(x_lo, m1h_ref[...], preferred_element_type=jnp.float32)
        c += jnp.dot(x_hi, m1l_ref[...], preferred_element_type=jnp.float32)

        c_hi = c.astype(jnp.bfloat16)
        c_lo = (c - c_hi.astype(jnp.float32)).astype(jnp.bfloat16)

        # Row taps + stride-U downsample (contract over the strip height).
        y = jnp.dot(m2h_ref[...], c_hi, preferred_element_type=jnp.float32)
        y += jnp.dot(m2h_ref[...], c_lo, preferred_element_type=jnp.float32)
        y += jnp.dot(m2l_ref[...], c_hi, preferred_element_type=jnp.float32)

        o_ref[...] = y.astype(o_ref.dtype)

    return kernel


def conv2d_const_kernel_forward(x, kwidth, ksigma, undersampling):
    """x: (N, 1, H, W) -> (N, 1, Ho, Wo); matches Conv2dConstKernel.forward."""
    x = jnp.asarray(x, jnp.float32)
    N, C, H, W = x.shape
    assert C == 1, "weight is (1,1,K,K): F.conv2d requires a single input channel"
    U = int(undersampling)
    pad = kwidth // 2
    assert pad < H and pad < W, "reflection pad requires pad < H and pad < W"

    w1 = _const_kernel_1d(int(kwidth), float(ksigma), U)
    K = int(w1.shape[0])

    Hp, Wp = H + 2 * pad, W + 2 * pad
    Ho = (Hp - K) // U + 1
    Wo = (Wp - K) // U + 1
    assert Ho >= 1 and Wo >= 1

    # ---- Tile selection ----------------------------------------------------
    # Lane-dense output tiles: TW = 256 for real sizes (fills the 256-wide MXU
    # on v6e/v7x), 128 minimum.  Caps shrink with U so input strips stay small;
    # row tiles are balanced to minimise sublane padding.
    tw_cap = max(128, min(256, (1024 // U) // 128 * 128))
    th_cap = max(8, min(256, (512 // U) // 8 * 8))
    TW = min(tw_cap, _round_up(Wo, 128))
    n_w = _cdiv(Wo, TW)
    WoP = n_w * TW
    n_h = _cdiv(Ho, th_cap)
    TH = _round_up(_cdiv(Ho, n_h), 8)
    HoP = n_h * TH

    BH, BW = TH * U, TW * U                        # strip stride (rows / cols)
    SH = _round_up((TH - 1) * U + K, 8)            # strip rows incl. halo
    SW = _round_up((TW - 1) * U + K, 128)          # strip cols incl. halo

    # Padded-image extents: every strip (incl. the last one) stays in bounds
    # for the manual DMAs, and covers the reflection-padded image.
    HR = _round_up(max(Hp, (n_h - 1) * BH + SH), 8)
    WR = _round_up(max(Wp, (n_w - 1) * BW + SW), 128)

    # Only glue left in the wrapper: reflection pad + zero pad for alignment.
    xp = jnp.pad(x[:, 0], ((0, 0), (pad, pad), (pad, pad)), mode="reflect")
    xp = jnp.pad(xp, ((0, 0), (0, HR - Hp), (0, WR - Wp)))

    m1h, m1l, m2h, m2l = _band_constants(kwidth, ksigma, U, TH, TW, SH, SW)

    # Exact VMEM budget; never clamped below the actual requirement.
    f32, bf16 = 4, 2
    vmem_need = (2 * SH * SW * f32             # double-buffered input strips
                 + 2 * SH * SW * bf16 * 2      # x hi/lo temporaries
                 + 2 * 2 * SW * TW * bf16      # m1 hi/lo (pipeline double-buffers)
                 + 2 * 2 * TH * SH * bf16      # m2 hi/lo
                 + 2 * TH * TW * f32           # output block
                 + 2 * SH * TW * f32)          # intermediate c (+ hi/lo headroom)
    vmem_limit = int(min(max(vmem_need + (8 << 20), 32 << 20), 100 << 20))

    kernel = _make_kernel(n_w, BH, BW, SH, SW)

    # TODO(synk): single-buffer the four grid-constant band inputs via
    # pipeline_mode=pl.Buffered(1); as bf16 they are <1 MiB total, so the
    # default double-buffer duplication is now negligible.
    out = pl.pallas_call(
        kernel,
        out_shape=jax.ShapeDtypeStruct((N, HoP, WoP), jnp.float32),
        grid=(N, n_h, n_w),
        in_specs=[
            pl.BlockSpec(memory_space=pl.ANY),                # padded image (HBM)
            pl.BlockSpec((SW, TW), lambda n, i, j: (0, 0)),   # m1 hi (constant)
            pl.BlockSpec((SW, TW), lambda n, i, j: (0, 0)),   # m1 lo (constant)
            pl.BlockSpec((TH, SH), lambda n, i, j: (0, 0)),   # m2 hi (constant)
            pl.BlockSpec((TH, SH), lambda n, i, j: (0, 0)),   # m2 lo (constant)
        ],
        out_specs=pl.BlockSpec((None, TH, TW), lambda n, i, j: (n, i, j)),
        scratch_shapes=[
            pltpu.VMEM((2, SH, SW), jnp.float32),             # strip double buffer
            pltpu.SemaphoreType.DMA((2,)),
        ],
        compiler_params=pltpu.CompilerParams(
            dimension_semantics=("parallel", "parallel", "arbitrary"),
            vmem_limit_bytes=vmem_limit,
        ),
    )(xp, m1h, m1l, m2h, m2l)

    # Slice off the tile padding (output is U^2 x smaller than the input; cheap).
    return out[:, None, :Ho, :Wo]


# ---------------------------------------------------------------------------
# Pure-numpy reference: F.conv2d(reflection_pad(x), kernel2d, stride=U)
# ---------------------------------------------------------------------------
def reference_forward(x_np, kernel2d, kwidth, undersampling):
    pad = kwidth // 2
    U = undersampling
    K = kernel2d.shape[0]
    xp = np.pad(x_np, ((0, 0), (0, 0), (pad, pad), (pad, pad)), mode="reflect")
    N, _, Hp, Wp = xp.shape
    Ho = (Hp - K) // U + 1
    Wo = (Wp - K) // U + 1
    y = np.zeros((N, 1, Ho, Wo), np.float32)
    for n in range(N):
        for i in range(Ho):
            for j in range(Wo):
                y[n, 0, i, j] = (xp[n, 0, i * U:i * U + K, j * U:j * U + K]
                                 * kernel2d).sum()
    return y


if __name__ == "__main__":
    kwidth = 5
    ksigma = 1.5
    undersampling = 2

    key = jax.random.PRNGKey(0)
    x = jax.random.normal(key, (2, 1, 16, 16), dtype=jnp.float32)

    y = conv2d_const_kernel_forward(x, kwidth, ksigma, undersampling)
    y = jax.block_until_ready(y)

    kernel2d = build_const_kernel_2d(kwidth, ksigma, undersampling)
    y_ref = reference_forward(np.asarray(x), kernel2d, kwidth, undersampling)
    assert y.shape == y_ref.shape, (y.shape, y_ref.shape)
    max_err = float(np.max(np.abs(np.asarray(y) - y_ref)))
    # bf16x3 matmuls keep ~1e-5 relative accuracy -> comfortably inside 1e-3.
    assert np.allclose(np.asarray(y), y_ref, atol=1e-3, rtol=1e-3), max_err

    print("KERNEL_OK")
</pallas_src>

<mosaic_0001>
module attributes {stable_mosaic.version = 11 : i64} {
  func.func @kernel(%arg0: i32, %arg1: i32, %arg2: i32, %arg3: memref<2x24x384xf32, #tpu.memory_space<any>>, %arg4: memref<384x128xbf16, #tpu.memory_space<vmem>>, %arg5: memref<384x128xbf16, #tpu.memory_space<vmem>>, %arg6: memref<8x24xbf16, #tpu.memory_space<vmem>>, %arg7: memref<8x24xbf16, #tpu.memory_space<vmem>>, %arg8: memref<1x8x128xf32, #tpu.memory_space<vmem>>, %arg9: memref<2x24x384xf32, #tpu.memory_space<vmem>>, %arg10: memref<2x!tpu.dma_semaphore, #tpu.memory_space<semaphore_mem>>) attributes {dimension_semantics = [#tpu.dimension_semantics<parallel>, #tpu.dimension_semantics<parallel>, #tpu.dimension_semantics<arbitrary>], iteration_bounds = array<i64: 2, 1, 1>, scalar_prefetch = 0 : i64, scratch_operands = 2 : i64, tpu.core_type = #tpu.core_type<tc>, window_params = [{}, {pipeline_mode = #tpu.pipeline_mode<synchronous>, transform_indices = @transform_1, window_bounds = array<i64: 384, 128>}, {pipeline_mode = #tpu.pipeline_mode<synchronous>, transform_indices = @transform_2, window_bounds = array<i64: 384, 128>}, {pipeline_mode = #tpu.pipeline_mode<synchronous>, transform_indices = @transform_3, window_bounds = array<i64: 8, 24>}, {pipeline_mode = #tpu.pipeline_mode<synchronous>, transform_indices = @transform_4, window_bounds = array<i64: 8, 24>}, {transform_indices = @transform_5, window_bounds = array<i64: 1, 8, 128>}]} {
    %c1_i32 = arith.constant 1 : i32
    %0 = arith.andi %arg2, %c1_i32 : i32
    %c0_i32 = arith.constant 0 : i32
    %1 = arith.cmpi eq, %arg2, %c0_i32 : i32
    %2 = arith.extui %1 : i1 to i32
    %c0_i32_0 = arith.constant 0 : i32
    %3 = arith.cmpi ne, %2, %c0_i32_0 : i32
    scf.if %3 {
      %c16_i32 = arith.constant 16 : i32
      %44 = arith.muli %arg1, %c16_i32 : i32
      %45 = tpu.assume_multiple %44, 8 : i32
      %c256_i32 = arith.constant 256 : i32
      %46 = arith.muli %arg2, %c256_i32 : i32
      %47 = tpu.assume_multiple %46, 128 : i32
      %48 = tpu.memref_slice %arg3[%arg0, %45, %47] : memref<2x24x384xf32, #tpu.memory_space<any>> -> memref<1x24x384xf32, #tpu.memory_space<any>>
      %49 = tpu.memref_squeeze %48 : memref<1x24x384xf32, #tpu.memory_space<any>> -> memref<24x384xf32, #tpu.memory_space<any>>
      %c0_i32_29 = arith.constant 0 : i32
      %c0_i32_30 = arith.constant 0 : i32
      %50 = tpu.memref_slice %arg9[%0, %c0_i32_29, %c0_i32_30] : memref<2x24x384xf32, #tpu.memory_space<vmem>> -> memref<1x24x384xf32, #tpu.memory_space<vmem>>
      %51 = tpu.memref_squeeze %50 : memref<1x24x384xf32, #tpu.memory_space<vmem>> -> memref<24x384xf32, #tpu.memory_space<vmem>>
      %52 = tpu.memref_slice %arg10[%0] : memref<2x!tpu.dma_semaphore, #tpu.memory_space<semaphore_mem>> -> memref<1x!tpu.dma_semaphore, #tpu.memory_space<semaphore_mem>>
      %53 = tpu.memref_squeeze %52 : memref<1x!tpu.dma_semaphore, #tpu.memory_space<semaphore_mem>> -> memref<!tpu.dma_semaphore, #tpu.memory_space<semaphore_mem>>
      tpu.enqueue_dma source(%49 : memref<24x384xf32, #tpu.memory_space<any>>) target(%51 : memref<24x384xf32, #tpu.memory_space<vmem>>) target_semaphore(%53 : memref<!tpu.dma_semaphore, #tpu.memory_space<semaphore_mem>>)
    } else {
    }
    %c1_i32_1 = arith.constant 1 : i32
    %4 = arith.addi %arg2, %c1_i32_1 : i32
    %c1_i32_2 = arith.constant 1 : i32
    %5 = arith.cmpi slt, %4, %c1_i32_2 : i32
    %6 = arith.extui %5 : i1 to i32
    %c0_i32_3 = arith.constant 0 : i32
    %7 = arith.cmpi ne, %6, %c0_i32_3 : i32
    scf.if %7 {
      %c1_i32_29 = arith.constant 1 : i32
      %44 = arith.addi %arg2, %c1_i32_29 : i32
      %c1_i32_30 = arith.constant 1 : i32
      %45 = arith.subi %c1_i32_30, %0 : i32
      %c16_i32 = arith.constant 16 : i32
      %46 = arith.muli %arg1, %c16_i32 : i32
      %47 = tpu.assume_multiple %46, 8 : i32
      %c256_i32 = arith.constant 256 : i32
      %48 = arith.muli %44, %c256_i32 : i32
      %49 = tpu.assume_multiple %48, 128 : i32
      %50 = tpu.memref_slice %arg3[%arg0, %47, %49] : memref<2x24x384xf32, #tpu.memory_space<any>> -> memref<1x24x384xf32, #tpu.memory_space<any>>
      %51 = tpu.memref_squeeze %50 : memref<1x24x384xf32, #tpu.memory_space<any>> -> memref<24x384xf32, #tpu.memory_space<any>>
      %c0_i32_31 = arith.constant 0 : i32
      %c0_i32_32 = arith.constant 0 : i32
      %52 = tpu.memref_slice %arg9[%45, %c0_i32_31, %c0_i32_32] : memref<2x24x384xf32, #tpu.memory_space<vmem>> -> memref<1x24x384xf32, #tpu.memory_space<vmem>>
      %53 = tpu.memref_squeeze %52 : memref<1x24x384xf32, #tpu.memory_space<vmem>> -> memref<24x384xf32, #tpu.memory_space<vmem>>
      %54 = tpu.memref_slice %arg10[%45] : memref<2x!tpu.dma_semaphore, #tpu.memory_space<semaphore_mem>> -> memref<1x!tpu.dma_semaphore, #tpu.memory_space<semaphore_mem>>
      %55 = tpu.memref_squeeze %54 : memref<1x!tpu.dma_semaphore, #tpu.memory_space<semaphore_mem>> -> memref<!tpu.dma_semaphore, #tpu.memory_space<semaphore_mem>>
      tpu.enqueue_dma source(%51 : memref<24x384xf32, #tpu.memory_space<any>>) target(%53 : memref<24x384xf32, #tpu.memory_space<vmem>>) target_semaphore(%55 : memref<!tpu.dma_semaphore, #tpu.memory_space<semaphore_mem>>)
    } else {
    }
    %c0_i32_4 = arith.constant 0 : i32
    %c0_i32_5 = arith.constant 0 : i32
    %8 = tpu.memref_slice %arg3[%arg0, %c0_i32_4, %c0_i32_5] : memref<2x24x384xf32, #tpu.memory_space<any>> -> memref<1x24x384xf32, #tpu.memory_space<any>>
    %9 = tpu.memref_squeeze %8 : memref<1x24x384xf32, #tpu.memory_space<any>> -> memref<24x384xf32, #tpu.memory_space<any>>
    %c0_i32_6 = arith.constant 0 : i32
    %c0_i32_7 = arith.constant 0 : i32
    %10 = tpu.memref_slice %arg9[%0, %c0_i32_6, %c0_i32_7] : memref<2x24x384xf32, #tpu.memory_space<vmem>> -> memref<1x24x384xf32, #tpu.memory_space<vmem>>
    %11 = tpu.memref_squeeze %10 : memref<1x24x384xf32, #tpu.memory_space<vmem>> -> memref<24x384xf32, #tpu.memory_space<vmem>>
    %12 = tpu.memref_slice %arg10[%0] : memref<2x!tpu.dma_semaphore, #tpu.memory_space<semaphore_mem>> -> memref<1x!tpu.dma_semaphore, #tpu.memory_space<semaphore_mem>>
    %13 = tpu.memref_squeeze %12 : memref<1x!tpu.dma_semaphore, #tpu.memory_space<semaphore_mem>> -> memref<!tpu.dma_semaphore, #tpu.memory_space<semaphore_mem>>
    tpu.wait_dma2 semaphore(%13 : memref<!tpu.dma_semaphore, #tpu.memory_space<semaphore_mem>>) src(%9 : memref<24x384xf32, #tpu.memory_space<any>>) dst(%11 : memref<24x384xf32, #tpu.memory_space<vmem>>)
    %14 = arith.index_cast %0 : i32 to index
    %c0 = arith.constant 0 : index
    %c0_8 = arith.constant 0 : index
    %15 = vector.load %arg9[%14, %c0, %c0_8] : memref<2x24x384xf32, #tpu.memory_space<vmem>>, vector<1x24x384xf32>
    %16 = vector.shape_cast %15 : vector<1x24x384xf32> to vector<24x384xf32>
    %17 = arith.truncf %16 : vector<24x384xf32> to vector<24x384xbf16>
    %18 = arith.extf %17 : vector<24x384xbf16> to vector<24x384xf32>
    %19 = arith.subf %16, %18 : vector<24x384xf32>
    %20 = arith.truncf %19 : vector<24x384xf32> to vector<24x384xbf16>
    %c0_9 = arith.constant 0 : index
    %c0_10 = arith.constant 0 : index
    %21 = vector.load %arg4[%c0_9, %c0_10] : memref<384x128xbf16, #tpu.memory_space<vmem>>, vector<384x128xbf16>
    %cst = arith.constant dense<0.000000e+00> : vector<24x128xf32>
    %22 = tpu.matmul %17, %21, %cst {dimension_numbers = #tpu.dot_dimension_numbers<[1], [0], [0], [1], [0, 0, 1, 1], [], []>} : vector<24x384xbf16>, vector<384x128xbf16>, vector<24x128xf32> -> vector<24x128xf32>
    %c0_11 = arith.constant 0 : index
    %c0_12 = arith.constant 0 : index
    %23 = vector.load %arg4[%c0_11, %c0_12] : memref<384x128xbf16, #tpu.memory_space<vmem>>, vector<384x128xbf16>
    %cst_13 = arith.constant dense<0.000000e+00> : vector<24x128xf32>
    %24 = tpu.matmul %20, %23, %cst_13 {dimension_numbers = #tpu.dot_dimension_numbers<[1], [0], [0], [1], [0, 0, 1, 1], [], []>} : vector<24x384xbf16>, vector<384x128xbf16>, vector<24x128xf32> -> vector<24x128xf32>
    %25 = arith.addf %22, %24 : vector<24x128xf32>
    %c0_14 = arith.constant 0 : index
    %c0_15 = arith.constant 0 : index
    %26 = vector.load %arg5[%c0_14, %c0_15] : memref<384x128xbf16, #tpu.memory_space<vmem>>, vector<384x128xbf16>
    %cst_16 = arith.constant dense<0.000000e+00> : vector<24x128xf32>
    %27 = tpu.matmul %17, %26, %cst_16 {dimension_numbers = #tpu.dot_dimension_numbers<[1], [0], [0], [1], [0, 0, 1, 1], [], []>} : vector<24x384xbf16>, vector<384x128xbf16>, vector<24x128xf32> -> vector<24x128xf32>
    %28 = arith.addf %25, %27 : vector<24x128xf32>
    %29 = arith.truncf %28 : vector<24x128xf32> to vector<24x128xbf16>
    %30 = arith.extf %29 : vector<24x128xbf16> to vector<24x128xf32>
    %31 = arith.subf %28, %30 : vector<24x128xf32>
    %32 = arith.truncf %31 : vector<24x128xf32> to vector<24x128xbf16>
    %c0_17 = arith.constant 0 : index
    %c0_18 = arith.constant 0 : index
    %33 = vector.load %arg6[%c0_17, %c0_18] : memref<8x24xbf16, #tpu.memory_space<vmem>>, vector<8x24xbf16>
    %cst_19 = arith.constant dense<0.000000e+00> : vector<8x128xf32>
    %34 = tpu.matmul %33, %29, %cst_19 {dimension_numbers = #tpu.dot_dimension_numbers<[1], [0], [0], [1], [0, 0, 1, 1], [], []>} : vector<8x24xbf16>, vector<24x128xbf16>, vector<8x128xf32> -> vector<8x128xf32>
    %c0_20 = arith.constant 0 : index
    %c0_21 = arith.constant 0 : index
    %35 = vector.load %arg6[%c0_20, %c0_21] : memref<8x24xbf16, #tpu.memory_space<vmem>>, vector<8x24xbf16>
    %cst_22 = arith.constant dense<0.000000e+00> : vector<8x128xf32>
    %36 = tpu.matmul %35, %32, %cst_22 {dimension_numbers = #tpu.dot_dimension_numbers<[1], [0], [0], [1], [0, 0, 1, 1], [], []>} : vector<8x24xbf16>, vector<24x128xbf16>, vector<8x128xf32> -> vector<8x128xf32>
    %37 = arith.addf %34, %36 : vector<8x128xf32>
    %c0_23 = arith.constant 0 : index
    %c0_24 = arith.constant 0 : index
    %38 = vector.load %arg7[%c0_23, %c0_24] : memref<8x24xbf16, #tpu.memory_space<vmem>>, vector<8x24xbf16>
    %cst_25 = arith.constant dense<0.000000e+00> : vector<8x128xf32>
    %39 = tpu.matmul %38, %29, %cst_25 {dimension_numbers = #tpu.dot_dimension_numbers<[1], [0], [0], [1], [0, 0, 1, 1], [], []>} : vector<8x24xbf16>, vector<24x128xbf16>, vector<8x128xf32> -> vector<8x128xf32>
    %40 = arith.addf %37, %39 : vector<8x128xf32>
    %c0_26 = arith.constant 0 : index
    %c0_27 = arith.constant 0 : index
    %c0_28 = arith.constant 0 : index
    %41 = vector.load %arg8[%c0_26, %c0_27, %c0_28] : memref<1x8x128xf32, #tpu.memory_space<vmem>>, vector<1x8x128xf32>
    %42 = vector.shape_cast %41 : vector<1x8x128xf32> to vector<8x128xf32>
    %43 = vector.shape_cast %40 : vector<8x128xf32> to vector<1x8x128xf32>
    tpu.vector_store %arg8[%c0_26, %c0_27, %c0_28], %43 {strides = array<i32>} : memref<1x8x128xf32, #tpu.memory_space<vmem>>, vector<1x8x128xf32>,
    return
  }
  func.func @transform_1(%arg0: i32, %arg1: i32, %arg2: i32) -> (i32, i32) {
    %c0_i32 = arith.constant 0 : i32
    %c0_i32_0 = arith.constant 0 : i32
    %c0_i32_1 = arith.constant 0 : i32
    return %c0_i32, %c0_i32_0 : i32, i32
  }
  func.func @transform_2(%arg0: i32, %arg1: i32, %arg2: i32) -> (i32, i32) {
    %c0_i32 = arith.constant 0 : i32
    %c0_i32_0 = arith.constant 0 : i32
    %c0_i32_1 = arith.constant 0 : i32
    return %c0_i32, %c0_i32_0 : i32, i32
  }
  func.func @transform_3(%arg0: i32, %arg1: i32, %arg2: i32) -> (i32, i32) {
    %c0_i32 = arith.constant 0 : i32
    %c0_i32_0 = arith.constant 0 : i32
    %c0_i32_1 = arith.constant 0 : i32
    return %c0_i32, %c0_i32_0 : i32, i32
  }
  func.func @transform_4(%arg0: i32, %arg1: i32, %arg2: i32) -> (i32, i32) {
    %c0_i32 = arith.constant 0 : i32
    %c0_i32_0 = arith.constant 0 : i32
    %c0_i32_1 = arith.constant 0 : i32
    return %c0_i32, %c0_i32_0 : i32, i32
  }
  func.func @transform_5(%arg0: i32, %arg1: i32, %arg2: i32) -> (i32, i32, i32) {
    %c0_i32 = arith.constant 0 : i32
    return %arg0, %arg1, %arg2 : i32, i32, i32
  }
}

</mosaic_0001>

<llo_original>
// kernel: tpu_custom_call.1
$region0: #{tpu_custom_call.1}
  #allocation0 [shape = 'u32[]', space=smem, size = 0x4, offset = 0x4, fixed_abs, tag = 'smem constant byte address 0x4 - core index']
  #allocation1 [shape = 'u32[144,128]{1,0:T(1,128)}', space=vmem, size = 0x12000, scoped, tag = 'internal scratch']
  #allocation2 [shape = 'f32[2,24,384]{2,1,0:T(8,128)}', space=vmem, size = 0x12000, scoped, tag = 'scratch operand']
  #allocation3 [shape = 's32[2]{0}', space=sflag, size = 0x8, scoped, tag = 'scratch operand']
  #allocation10 [shape = 's32[]', space=sflag, size = 0x4, offset = 0, fixed_abs, tag = 'sflag constant byte address 0x0 - dummy sync flag']
  #allocation11 [shape = 's32[]', space=sflag, size = 0x4, offset = 0, fixed_abs, tag = 'sflag constant byte address 0x0 - dummy sync flag']
  #allocation12 [shape = 'u32[]', space=smem, size = 0x4, offset = 0x44, fixed_abs, tag = 'smem constant byte address 0x44 - assertion arg 0']
  #allocation13 [shape = 'u32[]', space=smem, size = 0x4, offset = 0x48, fixed_abs, tag = 'smem constant byte address 0x48 - assertion arg 1']
  #allocation14 [shape = 's32[]', space=sflag, size = 0x4, offset = 0, fixed_abs, tag = 'sflag constant byte address 0x0 - dummy sync flag']
  #allocation15 [shape = 's32[]', space=sflag, size = 0x4, offset = 0, fixed_abs, tag = 'sflag constant byte address 0x0 - dummy sync flag']
  %s0 = inlined_call_operand.hbm [shape: f32[2,24,384], index: 0, kind: input, shape index: {}]
  %s1 = inlined_call_operand.hbm [shape: bf16[384,128], index: 1, kind: input, shape index: {}]
  %s2 = inlined_call_operand.hbm [shape: bf16[384,128], index: 2, kind: input, shape index: {}]
  %s3 = inlined_call_operand.vmem [shape: bf16[8,24], index: 3, kind: input, shape index: {}]
  %s4 = inlined_call_operand.vmem [shape: bf16[8,24], index: 4, kind: input, shape index: {}]
  %s5 = inlined_call_operand.hbm [shape: f32[2,8,128], index: 5, kind: output, shape index: {}]
  %s6 = sld [smem:[#allocation0]]
  $region73: #{tpu_custom_call.1} parent=0
    _
  %s8 = ssub.s32 1, %s6
  %s9 = scalar_select 0, %s8, %s6
  $region1: #{tpu_custom_call.1} parent=0
    #allocation4 [shape = 'u8[98304]{0}', space=vmem, size = 0x18000, scoped, tag = 'input window, operand 1, single buffered']
    #allocation5 [shape = 's32[2]{0}', space=sflag, size = 0x8, scoped, tag = 'scoped memory for tpu_custom_call.1']
    #allocation6 [shape = 's32[2]{0}', space=sflag, size = 0x8, scoped, tag = 'scoped memory for tpu_custom_call.1']
    #allocation7 [shape = 'u8[98304]{0}', space=vmem, size = 0x18000, scoped, tag = 'input window, operand 2, single buffered']
    #allocation8 [shape = 's32[1]{0}', space=sflag, size = 0x4, scoped, tag = 'scoped memory for tpu_custom_call.1']
    #allocation9 [shape = 'u8[8192]{0}', space=vmem, size = 0x2000, scoped, tag = 'output window, operand 0']
    %10 = vsyncpa [#allocation5], 0
    %11 = vsyncpa [#allocation8], 0
    %12 = vsyncpa [#allocation6], 0
    %s13 = scalar_lea.sflag [#allocation6], 1
    %14 = vsyncpa %s13, 0
    loop: start=0, step=1, limit=4
    $region2: #{tpu_custom_call.1} parent=1 // loop_pre_header
      _
    $region3: #{tpu_custom_call.1} parent=1 // loop_header
      %s16 = sphi 0, %s20
      %p17 = scmp.ge.s32.totalorder %s16, 4
      %s23 = sphi 0, %s42
      %s24 = sphi 0, %s38
      %s25 = sphi 0, %s34
      %s26 = sphi 0, %s23
      %s27 = sphi 0, %s24
      %s28 = sphi 0, %s25
      %s29 = sphi 0, %s26
      %s30 = sphi 0, %s27
      %s31 = sphi 0, %s28
      %s43 = sphi 0, %s43
      %s45 = sphi 0, %s43
      %s46 = sphi 0, %s45
      %s60 = sphi 0, %s46
      %s64 = sphi 0, %s64
      %s66 = sphi 0, %s64
      %s67 = sphi 0, %s66
      %s81 = sphi 0, %s67
      %s85 = sphi 0, %s85
      %s87 = sphi 0, %s85
      %s88 = sphi 0, %s87
      %s102 = sphi 0, %s88
      %s106 = sphi 0, %s106
      %s108 = sphi 0, %s106
      %s109 = sphi 0, %s108
      %s123 = sphi 0, %s109
      %s133 = sphi 0, %s135
      %s136 = sphi 0, %s133
      %s137 = sphi 0, %s136
      %s153 = sphi 0, %s137
    $region4: #{tpu_custom_call.1} parent=1 // loop_header_branch
      %19 = sbr.rel (%p17) target = $region8
    $region5: #{tpu_custom_call.1} parent=1 // loop_body
      %s21 = ssub.s32 %s16, 1
      %s22 = ssub.s32 %s16, 2
      %s32 = sadd.s32 1, %s25
      %p33 = scmp.ge.s32.totalorder %s32, 1
      %s34 = scalar_select %p33, 0, %s32
      %s35 = sadd.s32 1, %s24
      %s36 = scalar_select %p33, %s35, %s24
      %p37 = scmp.ge.s32.totalorder %s36, 1
      %s38 = scalar_select %p37, 0, %s36
      %s39 = sadd.s32 1, %s23
      %s40 = scalar_select %p37, %s39, %s23
      %p41 = scmp.ge.s32.totalorder %s40, 2
      %s42 = scalar_select %p41, 0, %s40
      %s44 = sadd.s32 %s43, 1
      %p47 = scmp.eq.s32.totalorder %s16, 1
      %p48 = scmp.ne.s32.totalorder %s43, %s45
      %p49 = scmp.eq.s32.totalorder %s16, 0
      %p50 = por %p48, %p49
      %p51 = scmp.ne.s32.totalorder %s43, %s45
      %p52 = scmp.eq.s32.totalorder %s21, 1
      %p53 = por %p51, %p52
      %p54 = scmp.ne.s32.totalorder %s45, %s46
      %p55 = scmp.eq.s32.totalorder %s21, 0
      %p56 = por %p54, %p55
      %p57 = scmp.ne.s32.totalorder %s45, %s46
      %p58 = scmp.eq.s32.totalorder %s22, 1
      %p59 = por %p57, %p58
      %p61 = scmp.ne.s32.totalorder %s46, %s60
      %p62 = scmp.eq.s32.totalorder %s22, 0
      %p63 = por %p61, %p62
      %s65 = sadd.s32 %s64, 1
      %p68 = scmp.eq.s32.totalorder %s16, 1
      %p69 = scmp.ne.s32.totalorder %s64, %s66
      %p70 = scmp.eq.s32.totalorder %s16, 0
      %p71 = por %p69, %p70
      %p72 = scmp.ne.s32.totalorder %s64, %s66
      %p73 = scmp.eq.s32.totalorder %s21, 1
      %p74 = por %p72, %p73
      %p75 = scmp.ne.s32.totalorder %s66, %s67
      %p76 = scmp.eq.s32.totalorder %s21, 0
      %p77 = por %p75, %p76
      %p78 = scmp.ne.s32.totalorder %s66, %s67
      %p79 = scmp.eq.s32.totalorder %s22, 1
      %p80 = por %p78, %p79
      %p82 = scmp.ne.s32.totalorder %s67, %s81
      %p83 = scmp.eq.s32.totalorder %s22, 0
      %p84 = por %p82, %p83
      %s86 = sadd.s32 %s85, 1
      %p89 = scmp.eq.s32.totalorder %s16, 1
      %p90 = scmp.ne.s32.totalorder %s85, %s87
      %p91 = scmp.eq.s32.totalorder %s16, 0
      %p92 = por %p90, %p91
      %p93 = scmp.ne.s32.totalorder %s85, %s87
      %p94 = scmp.eq.s32.totalorder %s21, 1
      %p95 = por %p93, %p94
      %p96 = scmp.ne.s32.totalorder %s87, %s88
      %p97 = scmp.eq.s32.totalorder %s21, 0
      %p98 = por %p96, %p97
      %p99 = scmp.ne.s32.totalorder %s87, %s88
      %p100 = scmp.eq.s32.totalorder %s22, 1
      %p101 = por %p99, %p100
      %p103 = scmp.ne.s32.totalorder %s88, %s102
      %p104 = scmp.eq.s32.totalorder %s22, 0
      %p105 = por %p103, %p104
      %s107 = sadd.s32 %s106, 1
      %p110 = scmp.eq.s32.totalorder %s16, 1
      %p111 = scmp.ne.s32.totalorder %s106, %s108
      %p112 = scmp.eq.s32.totalorder %s16, 0
      %p113 = por %p111, %p112
      %p114 = scmp.ne.s32.totalorder %s106, %s108
      %p115 = scmp.eq.s32.totalorder %s21, 1
      %p116 = por %p114, %p115
      %p117 = scmp.ne.s32.totalorder %s108, %s109
      %p118 = scmp.eq.s32.totalorder %s21, 0
      %p119 = por %p117, %p118
      %p120 = scmp.ne.s32.totalorder %s108, %s109
      %p121 = scmp.eq.s32.totalorder %s22, 1
      %p122 = por %p120, %p121
      %p124 = scmp.ne.s32.totalorder %s109, %s123
      %p125 = scmp.eq.s32.totalorder %s22, 0
      %p126 = por %p124, %p125
      %s127 = ssub.s32 %s23, %s42
      %s128 = ssub.s32 %s24, %s38
      %s129 = sor.u32 %s127, %s128
      %s130 = ssub.s32 %s25, %s34
      %s131 = sor.u32 %s129, %s130
      %p132 = scmp.eq.s32.totalorder %s131, 0
      %s134 = sadd.s32 %s133, 1
      %s135 = scalar_select %p132, %s133, %s134
      %p138 = pneg %p132
      %p139 = scmp.eq.s32.totalorder %s16, 1
      %p140 = por %p138, %p139
      %p141 = scmp.ne.s32.totalorder %s133, %s136
      %p142 = scmp.eq.s32.totalorder %s16, 0
      %p143 = por %p141, %p142
      %p144 = scmp.ne.s32.totalorder %s133, %s136
      %p145 = scmp.eq.s32.totalorder %s21, 1
      %p146 = por %p144, %p145
      %p147 = scmp.ne.s32.totalorder %s136, %s137
      %p148 = scmp.eq.s32.totalorder %s21, 0
      %p149 = por %p147, %p148
      %p150 = scmp.ne.s32.totalorder %s136, %s137
      %p151 = scmp.eq.s32.totalorder %s22, 1
      %p152 = por %p150, %p151
      %p154 = scmp.ne.s32.totalorder %s137, %s153
      %p155 = scmp.eq.s32.totalorder %s22, 0
      %p156 = por %p154, %p155
      %p157 = scmp.le.s32.totalorder 1, %s16
      %p158 = scmp.lt.s32.totalorder %s16, 3
      %p159 = pnand %p157, %p158
      %p160 = pneg %p159
      // Predicated region
      $region9: #{tpu_custom_call.1} parent=5 // pred_check
        _
      $region10: #{tpu_custom_call.1} parent=5 // pred_check_branch
        %162 = sbr.rel (%p159) target = $region12
      $region11: #{tpu_custom_call.1} parent=5 // pred_region
        %s163 = ssub.s32 %s16, 1
        // Predicated region
        $region13: #{tpu_custom_call.1} parent=11 // pred_check
          %p164 = pneg %p56
        $region14: #{tpu_custom_call.1} parent=11 // pred_check_branch
          %166 = sbr.rel (%p164) target = $region16
        $region15: #{tpu_custom_call.1} parent=11 // pred_region
          %s168 = ssub.s32 3072, 3072
          %169 = vsyncadd [#allocation5], %s168
          %s170 = sshll.u32 [#allocation4], 4
          %s171 = int_to_ptr.vmem [resolvable:$true] %s170
          %176 = dma.hbm_to_vmem [thread:$0]  %s1, 3072, %s171, [#allocation5], 64, 64, 4
        $region16: #{tpu_custom_call.1} parent=11 // pred_fallthru
          _
        // Predicated region
        $region17: #{tpu_custom_call.1} parent=11 // pred_check
          %p177 = pneg %p77
        $region18: #{tpu_custom_call.1} parent=11 // pred_check_branch
          %179 = sbr.rel (%p177) target = $region20
        $region19: #{tpu_custom_call.1} parent=11 // pred_region
          %s181 = ssub.s32 3072, 3072
          %182 = vsyncadd [#allocation8], %s181
          %s183 = sshll.u32 [#allocation7], 4
          %s184 = int_to_ptr.vmem [resolvable:$true] %s183
          %189 = dma.hbm_to_vmem [thread:$0]  %s2, 3072, %s184, [#allocation8], 64, 64, 4
        $region20: #{tpu_custom_call.1} parent=11 // pred_fallthru
          _
        // Predicated region
        $region21: #{tpu_custom_call.1} parent=11 // pred_check
          %p190 = pneg %p98
        $region22: #{tpu_custom_call.1} parent=11 // pred_check_branch
          %192 = sbr.rel (%p190) target = $region24
        $region23: #{tpu_custom_call.1} parent=11 // pred_region
          _
        $region24: #{tpu_custom_call.1} parent=11 // pred_fallthru
          _
        // Predicated region
        $region25: #{tpu_custom_call.1} parent=11 // pred_check
          %p193 = pneg %p119
        $region26: #{tpu_custom_call.1} parent=11 // pred_check_branch
          %195 = sbr.rel (%p193) target = $region28
        $region27: #{tpu_custom_call.1} parent=11 // pred_region
          _
        $region28: #{tpu_custom_call.1} parent=11 // pred_fallthru
          _
      $region12: #{tpu_custom_call.1} parent=5 // pred_fallthru
        _
      %p196 = scmp.lt.s32.totalorder %s16, 2
      // Predicated region
      $region29: #{tpu_custom_call.1} parent=5 // pred_check
        %p197 = pneg %p196
      $region30: #{tpu_custom_call.1} parent=5 // pred_check_branch
        %199 = sbr.rel (%p197) target = $region32
      $region31: #{tpu_custom_call.1} parent=5 // pred_region
        _
      $region32: #{tpu_custom_call.1} parent=5 // pred_fallthru
        _
      %p200 = scmp.le.s32.totalorder 1, %s16
      %p201 = scmp.lt.s32.totalorder %s16, 3
      %p202 = pnand %p200, %p201
      %p203 = pneg %p202
      // Predicated region
      $region33: #{tpu_custom_call.1} parent=5 // pred_check
        _
      $region34: #{tpu_custom_call.1} parent=5 // pred_check_branch
        %205 = sbr.rel (%p202) target = $region36
      $region35: #{tpu_custom_call.1} parent=5 // pred_region
        %s206 = ssub.s32 %s16, 1
        // Predicated region
        $region37: #{tpu_custom_call.1} parent=35 // pred_check
          %p207 = pneg %p56
        $region38: #{tpu_custom_call.1} parent=35 // pred_check_branch
          %209 = sbr.rel (%p207) target = $region40
        $region39: #{tpu_custom_call.1} parent=35 // pred_region
          %210 = dma.done [#allocation5], 3072
        $region40: #{tpu_custom_call.1} parent=35 // pred_fallthru
          _
        // Predicated region
        $region41: #{tpu_custom_call.1} parent=35 // pred_check
          %p211 = pneg %p77
        $region42: #{tpu_custom_call.1} parent=35 // pred_check_branch
          %213 = sbr.rel (%p211) target = $region44
        $region43: #{tpu_custom_call.1} parent=35 // pred_region
          %214 = dma.done [#allocation8], 3072
        $region44: #{tpu_custom_call.1} parent=35 // pred_fallthru
          _
        %p215 = pneg %p56
        %p216 = pneg %p53
        %p217 = pneg %p77
        %p218 = pneg %p74
        %p219 = pneg %p98
        %p220 = pneg %p95
        %p221 = pneg %p119
        %p222 = pneg %p116
        %p223 = pneg %p149
        %p224 = pneg %p146
        %s225 = sand.u32 %s136, 1
        %s226 = scalar_lea.sflag [#allocation6], %s225
        %s227 = sand.u32 %s136, 1
        %s228 = smul.addr %s227, 8
        %s229 = scalar_lea.vmem [#allocation9], %s228
        %s231 = sand.u32 %s28, 1
        %p232 = scmp.eq.s32.totalorder %s28, 0
        // Predicated region
        $region45: #{tpu_custom_call.1} parent=35 // pred_check
          %p233 = pneg %p232
        $region46: #{tpu_custom_call.1} parent=35 // pred_check_branch
          %235 = sbr.rel (%p233) target = $region48
        $region47: #{tpu_custom_call.1} parent=35 // pred_region
          %s236 = smul.u32 %s27, 16
          %s237 = smul.u32 %s28, 256
          %s238 = sshra.s32 %s237, 7
          %s239 = sand.u32 %s237, 127
          %s240 = sshra.s32 %s236, 3
          %s241 = sand.u32 %s236, 7
          %s242 = smul.u32 %s240, 3
          %s243 = sadd.s32 %s238, %s242
          %s244 = smul.u32 %s26, 9
          %s245 = sadd.s32 %s243, %s244
          %s246 = smul.addr %s245, 128
          %s247 = scalar_lea.hbm %s0, %s246
          %s248 = smul.u32 %s231, 9
          %s249 = smul.addr %s248, 8
          %s250 = scalar_lea.vmem [#allocation2], %s249
          %s251 = scalar_lea.sflag [#allocation3], %s231
          // Predicated region
          $region49: #{tpu_custom_call.1} parent=47 // pred_check
            _
          $region50: #{tpu_custom_call.1} parent=47 // pred_check_branch
            %253 = sbr.rel target = $region52
          $region51: #{tpu_custom_call.1} parent=47 // pred_region
            %254 = sst [smem:[#allocation12]] [#allocation11]
            %255 = sst [smem:[#allocation13]] [#allocation10]
          $region52: #{tpu_custom_call.1} parent=47 // pred_fallthru
            _
          %257 = shalt.err (0)
          %s259 = sshll.u32 %s250, 4
          %s260 = int_to_ptr.vmem [resolvable:$true] %s259
          %262 = dma.hbm_to_vmem [thread:$0]  %s247, 1152, %s260, %s251
        $region48: #{tpu_custom_call.1} parent=35 // pred_fallthru
          _
        %s263 = sadd.s32 %s28, 1
        %p264 = scmp.lt.s32.totalorder %s263, 1
        // Predicated region
        $region53: #{tpu_custom_call.1} parent=35 // pred_check
          %p265 = pneg %p264
        $region54: #{tpu_custom_call.1} parent=35 // pred_check_branch
          %267 = sbr.rel (%p265) target = $region56
        $region55: #{tpu_custom_call.1} parent=35 // pred_region
          %s268 = ssub.s32 1, %s231
          %s269 = smul.u32 %s27, 16
          %s270 = smul.u32 %s263, 256
          %s271 = sshra.s32 %s270, 7
          %s272 = sand.u32 %s270, 127
          %s273 = sshra.s32 %s269, 3
          %s274 = sand.u32 %s269, 7
          %s275 = smul.u32 %s273, 3
          %s276 = sadd.s32 %s271, %s275
          %s277 = smul.u32 %s26, 9
          %s278 = sadd.s32 %s276, %s277
          %s279 = smul.addr %s278, 128
          %s280 = scalar_lea.hbm %s0, %s279
          %s281 = smul.u32 %s268, 9
          %s282 = smul.addr %s281, 8
          %s283 = scalar_lea.vmem [#allocation2], %s282
          %s284 = scalar_lea.sflag [#allocation3], %s268
          // Predicated region
          $region57: #{tpu_custom_call.1} parent=55 // pred_check
            _
          $region58: #{tpu_custom_call.1} parent=55 // pred_check_branch
            %286 = sbr.rel target = $region60
          $region59: #{tpu_custom_call.1} parent=55 // pred_region
            %287 = sst [smem:[#allocation12]] [#allocation15]
            %288 = sst [smem:[#allocation13]] [#allocation14]
          $region60: #{tpu_custom_call.1} parent=55 // pred_fallthru
            _
          %290 = shalt.err (0)
          %s292 = sshll.u32 %s283, 4
          %s293 = int_to_ptr.vmem [resolvable:$true] %s292
          %295 = dma.hbm_to_vmem [thread:$0]  %s280, 1152, %s293, %s284
        $region56: #{tpu_custom_call.1} parent=35 // pred_fallthru
          _
        %s296 = smul.u32 %s231, 9
        %s297 = smul.addr %s296, 8
        %s298 = scalar_lea.vmem [#allocation2], %s297
        %s299 = scalar_lea.sflag [#allocation3], %s231
        %s300 = smul.u32 8, 3
        %s301 = smul.u32 %s300, 3
        %s302 = sshll.u32 %s301, 4
        %303 = dma.done %s299, %s302
        %v304 = vld [vmem:[%s298] sm:$0xff]
        %v305 = vld [vmem:[%s298 + $0x8] sm:$0xff]
        %v306 = vld [vmem:[%s298 + $0x10] sm:$0xff]
        %v307 = vld [vmem:[%s298 + $0x18] sm:$0xff]
        %v308 = vld [vmem:[%s298 + $0x20] sm:$0xff]
        %v309 = vld [vmem:[%s298 + $0x28] sm:$0xff]
        %v310 = vld [vmem:[%s298 + $0x30] sm:$0xff]
        %v311 = vld [vmem:[%s298 + $0x38] sm:$0xff]
        %v312 = vld [vmem:[%s298 + $0x40] sm:$0xff]
        %v313 = vpack.c.bf16 %v307, %v304
        %v314 = vpack.c.bf16 %v308, %v305
        %v315 = vpack.c.bf16 %v309, %v306
        %v316 = vpack.c.bf16 %v310, %v310
        %v317 = vpack.c.bf16 %v311, %v311
        %v318 = vpack.c.bf16 %v312, %v312
        %v319 = vunpack.c.l.bf16 %v313
        %v320 = vunpack.c.l.bf16 %v314
        %v321 = vunpack.c.l.bf16 %v315
        %v322 = vunpack.c.h.bf16 %v313
        %v323 = vunpack.c.h.bf16 %v314
        %v324 = vunpack.c.h.bf16 %v315
        %v325 = vunpack.c.l.bf16 %v316
        %v326 = vunpack.c.l.bf16 %v317
        %v327 = vunpack.c.l.bf16 %v318
        %v328 = vsub.f32 %v304, %v319
        %v329 = vsub.f32 %v305, %v320
        %v330 = vsub.f32 %v306, %v321
        %v331 = vsub.f32 %v307, %v322
        %v332 = vsub.f32 %v308, %v323
        %v333 = vsub.f32 %v309, %v324
        %v334 = vsub.f32 %v310, %v325
        %v335 = vsub.f32 %v311, %v326
        %v336 = vsub.f32 %v312, %v327
        %v337 = vpack.c.bf16 %v331, %v328
        %v338 = vpack.c.bf16 %v332, %v329
        %v339 = vpack.c.bf16 %v333, %v330
        %v340 = vpack.c.bf16 %v334, %v334
        %v341 = vpack.c.bf16 %v335, %v335
        %v342 = vpack.c.bf16 %v336, %v336
        %v343 = vld [vmem:[#allocation4] sm:$0xf]
        %v344 = vld [vmem:[#allocation4 + $0x4] sm:$0xf]
        %v345 = vld [vmem:[#allocation4 + $0x8] sm:$0xf]
        %v346 = vld [vmem:[#allocation4 + $0xc] sm:$0xf]
        %v347 = vld [vmem:[#allocation4 + $0x10] sm:$0xf]
        %v348 = vld [vmem:[#allocation4 + $0x14] sm:$0xf]
        %v349 = vld [vmem:[#allocation4 + $0x18] sm:$0xf]
        %v350 = vld [vmem:[#allocation4 + $0x1c] sm:$0xf]
        %v351 = vld [vmem:[#allocation4 + $0x20] sm:$0xf]
        %v352 = vld [vmem:[#allocation4 + $0x24] sm:$0xf]
        %v353 = vld [vmem:[#allocation4 + $0x28] sm:$0xf]
        %v354 = vld [vmem:[#allocation4 + $0x2c] sm:$0xf]
        %v355 = vld [vmem:[#allocation4 + $0x30] sm:$0xf]
        %v356 = vld [vmem:[#allocation4 + $0x34] sm:$0xf]
        %v357 = vld [vmem:[#allocation4 + $0x38] sm:$0xf]
        %v358 = vld [vmem:[#allocation4 + $0x3c] sm:$0xf]
        %v359 = vld [vmem:[#allocation4 + $0x40] sm:$0xf]
        %v360 = vld [vmem:[#allocation4 + $0x44] sm:$0xf]
        %v361 = vld [vmem:[#allocation4 + $0x48] sm:$0xf]
        %v362 = vld [vmem:[#allocation4 + $0x4c] sm:$0xf]
        %v363 = vld [vmem:[#allocation4 + $0x50] sm:$0xf]
        %v364 = vld [vmem:[#allocation4 + $0x54] sm:$0xf]
        %v365 = vld [vmem:[#allocation4 + $0x58] sm:$0xf]
        %v366 = vld [vmem:[#allocation4 + $0x5c] sm:$0xf]
        %v367 = vld [vmem:[#allocation4 + $0x60] sm:$0xf]
        %v368 = vld [vmem:[#allocation4 + $0x64] sm:$0xf]
        %v369 = vld [vmem:[#allocation4 + $0x68] sm:$0xf]
        %v370 = vld [vmem:[#allocation4 + $0x6c] sm:$0xf]
        %v371 = vld [vmem:[#allocation4 + $0x70] sm:$0xf]
        %v372 = vld [vmem:[#allocation4 + $0x74] sm:$0xf]
        %v373 = vld [vmem:[#allocation4 + $0x78] sm:$0xf]
        %v374 = vld [vmem:[#allocation4 + $0x7c] sm:$0xf]
        %v375 = vld [vmem:[#allocation4 + $0x80] sm:$0xf]
        %v376 = vld [vmem:[#allocation4 + $0x84] sm:$0xf]
        %v377 = vld [vmem:[#allocation4 + $0x88] sm:$0xf]
        %v378 = vld [vmem:[#allocation4 + $0x8c] sm:$0xf]
        %v379 = vld [vmem:[#allocation4 + $0x90] sm:$0xf]
        %v380 = vld [vmem:[#allocation4 + $0x94] sm:$0xf]
        %v381 = vld [vmem:[#allocation4 + $0x98] sm:$0xf]
        %v382 = vld [vmem:[#allocation4 + $0x9c] sm:$0xf]
        %v383 = vld [vmem:[#allocation4 + $0xa0] sm:$0xf]
        %v384 = vld [vmem:[#allocation4 + $0xa4] sm:$0xf]
        %v385 = vld [vmem:[#allocation4 + $0xa8] sm:$0xf]
        %v386 = vld [vmem:[#allocation4 + $0xac] sm:$0xf]
        %v387 = vld [vmem:[#allocation4 + $0xb0] sm:$0xf]
        %v388 = vld [vmem:[#allocation4 + $0xb4] sm:$0xf]
        %v389 = vld [vmem:[#allocation4 + $0xb8] sm:$0xf]
        %v390 = vld [vmem:[#allocation4 + $0xbc] sm:$0xf]
        %v439 = vunpack.c.l.b16 %v343
        %v440 = vunpack.c.l.b16 %v344
        %v441 = vunpack.c.l.b16 %v345
        %v442 = vunpack.c.l.b16 %v346
        %v443 = vunpack.c.l.b16 %v347
        %v444 = vunpack.c.l.b16 %v348
        %v445 = vunpack.c.l.b16 %v349
        %v446 = vunpack.c.l.b16 %v350
        %v447 = vunpack.c.l.b16 %v351
        %v448 = vunpack.c.l.b16 %v352
        %v449 = vunpack.c.l.b16 %v353
        %v450 = vunpack.c.l.b16 %v354
        %v451 = vunpack.c.l.b16 %v355
        %v452 = vunpack.c.l.b16 %v356
        %v453 = vunpack.c.l.b16 %v357
        %v454 = vunpack.c.l.b16 %v358
        %v455 = vunpack.c.l.b16 %v359
        %v456 = vunpack.c.l.b16 %v360
        %v457 = vunpack.c.l.b16 %v361
        %v458 = vunpack.c.l.b16 %v362
        %v459 = vunpack.c.l.b16 %v363
        %v460 = vunpack.c.l.b16 %v364
        %v461 = vunpack.c.l.b16 %v365
        %v462 = vunpack.c.l.b16 %v366
        %v463 = vunpack.c.l.b16 %v367
        %v464 = vunpack.c.l.b16 %v368
        %v465 = vunpack.c.l.b16 %v369
        %v466 = vunpack.c.l.b16 %v370
        %v467 = vunpack.c.l.b16 %v371
        %v468 = vunpack.c.l.b16 %v372
        %v469 = vunpack.c.l.b16 %v373
        %v470 = vunpack.c.l.b16 %v374
        %v471 = vunpack.c.l.b16 %v375
        %v472 = vunpack.c.l.b16 %v376
        %v473 = vunpack.c.l.b16 %v377
        %v474 = vunpack.c.l.b16 %v378
        %v475 = vunpack.c.l.b16 %v379
        %v476 = vunpack.c.l.b16 %v380
        %v477 = vunpack.c.l.b16 %v381
        %v478 = vunpack.c.l.b16 %v382
        %v479 = vunpack.c.l.b16 %v383
        %v480 = vunpack.c.l.b16 %v384
        %v481 = vunpack.c.l.b16 %v385
        %v482 = vunpack.c.l.b16 %v386
        %v483 = vunpack.c.l.b16 %v387
        %v484 = vunpack.c.l.b16 %v388
        %v485 = vunpack.c.l.b16 %v389
        %v486 = vunpack.c.l.b16 %v390
        %v487 = vpack.c.b16 %v440, %v439
        %v488 = vpack.c.b16 %v442, %v441
        %v489 = vpack.c.b16 %v444, %v443
        %v490 = vpack.c.b16 %v446, %v445
        %v491 = vpack.c.b16 %v448, %v447
        %v492 = vpack.c.b16 %v450, %v449
        %v493 = vpack.c.b16 %v452, %v451
        %v494 = vpack.c.b16 %v454, %v453
        %v495 = vpack.c.b16 %v456, %v455
        %v496 = vpack.c.b16 %v458, %v457
        %v497 = vpack.c.b16 %v460, %v459
        %v498 = vpack.c.b16 %v462, %v461
        %v499 = vpack.c.b16 %v464, %v463
        %v500 = vpack.c.b16 %v466, %v465
        %v501 = vpack.c.b16 %v468, %v467
        %v502 = vpack.c.b16 %v470, %v469
        %v503 = vpack.c.b16 %v472, %v471
        %v504 = vpack.c.b16 %v474, %v473
        %v505 = vpack.c.b16 %v476, %v475
        %v506 = vpack.c.b16 %v478, %v477
        %v507 = vpack.c.b16 %v480, %v479
        %v508 = vpack.c.b16 %v482, %v481
        %v509 = vpack.c.b16 %v484, %v483
        %v510 = vpack.c.b16 %v486, %v485
        %535 = vmatprep.subr.bf16.mxu0 0
        %536 = vmatpush1.bf16.msra.mxu0 %v487
        %537 = vmatprep.subr.bf16.mxu0 0
        %538 = vmatpush1.bf16.msra.mxu0 %v488
        %539 = vmatprep.subr.bf16.mxu0 0
        %540 = vmatpush1.bf16.msra.mxu0 %v489
        %541 = vmatprep.subr.bf16.mxu0 0
        %542 = vmatpush1.bf16.msra.mxu0 %v490
        %543 = vmatprep.subr.bf16.mxu0 0
        %544 = vmatpush1.bf16.msra.mxu0 %v491
        %545 = vmatprep.subr.bf16.mxu0 0
        %546 = vmatpush1.bf16.msra.mxu0 %v492
        %547 = vmatprep.subr.bf16.mxu0 0
        %548 = vmatpush1.bf16.msra.mxu0 %v493
        %549 = vmatprep.subr.bf16.mxu0 0
        %550 = vmatpush1.bf16.msra.mxu0 %v494
        %551 = vmatprep.subr.bf16.mxu0 0
        %552 = vmatpush1.bf16.msra.mxu0 %v495
        %553 = vmatprep.subr.bf16.mxu0 0
        %554 = vmatpush1.bf16.msra.mxu0 %v496
        %555 = vmatprep.subr.bf16.mxu0 0
        %556 = vmatpush1.bf16.msra.mxu0 %v497
        %557 = vmatprep.subr.bf16.mxu0 0
        %558 = vmatpush1.bf16.msra.mxu0 %v498
        %559 = vmatprep.subr.bf16.mxu0 0
        %560 = vmatpush1.bf16.msra.mxu0 %v499
        %561 = vmatprep.subr.bf16.mxu0 0
        %562 = vmatpush1.bf16.msra.mxu0 %v500
        %563 = vmatprep.subr.bf16.mxu0 0
        %564 = vmatpush1.bf16.msra.mxu0 %v501
        %565 = vmatprep.subr.bf16.mxu0 0
        %566 = vmatpush1.bf16.msra.mxu0 %v502
        %567 = vmatprep.mubr.bf16.mxu0 %v338
        %568 = vmatmul.mubr.bf16.gmra.mrb[0].mxu0 %v337
        %v569 = vpop.f32.mrb[0].mxu0
        %v570 = vadd.f32 0.0, %v569
        %v571 = vpop.f32.mrb[0].mxu0
        %v572 = vpop.f32.mrb[0].mxu0
        %v573 = vadd.f32 0.0, %v572
        %v574 = vpop.f32.mrb[0].mxu0
        %575 = vmatprep.mubr.bf16.mxu0 %v341
        %576 = vmatmul.mubr.bf16.gmra.mrb[0].mxu0 %v340
        %v577 = vpop.f32.mrb[0].mxu0
        %v578 = vadd.f32 0.0, %v577
        %v579 = vpop.f32.mrb[0].mxu0
        %v580 = vpop.f32.mrb[0].mxu0
        %v581 = vpop.f32.mrb[0].mxu0
        %582 = vdwg.mxu0
        %583 = vmatprep.subr.bf16.mxu0 0
        %584 = vmatpush1.bf16.msra.mxu0 %v503
        %585 = vmatprep.subr.bf16.mxu0 0
        %586 = vmatpush1.bf16.msra.mxu0 %v504
        %587 = vmatprep.subr.bf16.mxu0 0
        %588 = vmatpush1.bf16.msra.mxu0 %v505
        %589 = vmatprep.subr.bf16.mxu0 0
        %590 = vmatpush1.bf16.msra.mxu0 %v506
        %591 = vmatprep.subr.bf16.mxu0 0
        %592 = vmatpush1.bf16.msra.mxu0 %v507
        %593 = vmatprep.subr.bf16.mxu0 0
        %594 = vmatpush1.bf16.msra.mxu0 %v508
        %595 = vmatprep.subr.bf16.mxu0 0
        %596 = vmatpush1.bf16.msra.mxu0 %v509
        %597 = vmatprep.subr.bf16.mxu0 0
        %598 = vmatpush1.bf16.msra.mxu0 %v510
        %599 = vmatprep.subr.bf16.mxu0 0
        %600 = vmatpush1.bf16.msra.mxu0 0
        %601 = vmatprep.subr.bf16.mxu0 0
        %602 = vmatpush1.bf16.msra.mxu0 0
        %603 = vmatprep.subr.bf16.mxu0 0
        %604 = vmatpush1.bf16.msra.mxu0 0
        %605 = vmatprep.subr.bf16.mxu0 0
        %606 = vmatpush1.bf16.msra.mxu0 0
        %607 = vmatprep.subr.bf16.mxu0 0
        %608 = vmatpush1.bf16.msra.mxu0 0
        %609 = vmatprep.subr.bf16.mxu0 0
        %610 = vmatpush1.bf16.msra.mxu0 0
        %611 = vmatprep.subr.bf16.mxu0 0
        %612 = vmatpush1.bf16.msra.mxu0 0
        %613 = vmatprep.subr.bf16.mxu0 0
        %614 = vmatpush1.bf16.msra.mxu0 0
        %615 = vmatprep.mubr.bf16.mxu0 0
        %616 = vmatmul.mubr.bf16.gmra.mrb[0].mxu0 %v339
        %v617 = vpop.f32.mrb[0].mxu0
        %v618 = vadd.f32 %v570, %v617
        %v619 = vpop.f32.mrb[0].mxu0
        %v620 = vpop.f32.mrb[0].mxu0
        %v621 = vadd.f32 %v573, %v620
        %v622 = vpop.f32.mrb[0].mxu0
        %623 = vmatprep.mubr.bf16.mxu0 0
        %624 = vmatmul.mubr.bf16.gmra.mrb[0].mxu0 %v342
        %v625 = vpop.f32.mrb[0].mxu0
        %v626 = vadd.f32 %v578, %v625
        %v627 = vpop.f32.mrb[0].mxu0
        %v628 = vpop.f32.mrb[0].mxu0
        %v629 = vpop.f32.mrb[0].mxu0
        %630 = vdwg.mxu0
        %631 = vmatprep.subr.bf16.mxu0 0
        %632 = vmatpush1.bf16.msra.mxu0 %v487
        %633 = vmatprep.subr.bf16.mxu0 0
        %634 = vmatpush1.bf16.msra.mxu0 %v488
        %635 = vmatprep.subr.bf16.mxu0 0
        %636 = vmatpush1.bf16.msra.mxu0 %v489
        %637 = vmatprep.subr.bf16.mxu0 0
        %638 = vmatpush1.bf16.msra.mxu0 %v490
        %639 = vmatprep.subr.bf16.mxu0 0
        %640 = vmatpush1.bf16.msra.mxu0 %v491
        %641 = vmatprep.subr.bf16.mxu0 0
        %642 = vmatpush1.bf16.msra.mxu0 %v492
        %643 = vmatprep.subr.bf16.mxu0 0
        %644 = vmatpush1.bf16.msra.mxu0 %v493
        %645 = vmatprep.subr.bf16.mxu0 0
        %646 = vmatpush1.bf16.msra.mxu0 %v494
        %647 = vmatprep.subr.bf16.mxu0 0
        %648 = vmatpush1.bf16.msra.mxu0 %v495
        %649 = vmatprep.subr.bf16.mxu0 0
        %650 = vmatpush1.bf16.msra.mxu0 %v496
        %651 = vmatprep.subr.bf16.mxu0 0
        %652 = vmatpush1.bf16.msra.mxu0 %v497
        %653 = vmatprep.subr.bf16.mxu0 0
        %654 = vmatpush1.bf16.msra.mxu0 %v498
        %655 = vmatprep.subr.bf16.mxu0 0
        %656 = vmatpush1.bf16.msra.mxu0 %v499
        %657 = vmatprep.subr.bf16.mxu0 0
        %658 = vmatpush1.bf16.msra.mxu0 %v500
        %659 = vmatprep.subr.bf16.mxu0 0
        %660 = vmatpush1.bf16.msra.mxu0 %v501
        %661 = vmatprep.subr.bf16.mxu0 0
        %662 = vmatpush1.bf16.msra.mxu0 %v502
        %663 = vmatprep.mubr.bf16.mxu0 %v314
        %664 = vmatmul.mubr.bf16.gmra.mrb[0].mxu0 %v313
        %v665 = vpop.f32.mrb[0].mxu0
        %v666 = vadd.f32 %v618, %v665
        %v667 = vpop.f32.mrb[0].mxu0
        %v668 = vpop.f32.mrb[0].mxu0
        %v669 = vadd.f32 %v621, %v668
        %v670 = vpop.f32.mrb[0].mxu0
        %671 = vmatprep.mubr.bf16.mxu0 %v317
        %672 = vmatmul.mubr.bf16.gmra.mrb[0].mxu0 %v316
        %v673 = vpop.f32.mrb[0].mxu0
        %v674 = vadd.f32 %v626, %v673
        %v675 = vpop.f32.mrb[0].mxu0
        %v676 = vpop.f32.mrb[0].mxu0
        %v677 = vpop.f32.mrb[0].mxu0
        %678 = vdwg.mxu0
        %679 = vmatprep.subr.bf16.mxu0 0
        %680 = vmatpush1.bf16.msra.mxu0 %v503
        %681 = vmatprep.subr.bf16.mxu0 0
        %682 = vmatpush1.bf16.msra.mxu0 %v504
        %683 = vmatprep.subr.bf16.mxu0 0
        %684 = vmatpush1.bf16.msra.mxu0 %v505
        %685 = vmatprep.subr.bf16.mxu0 0
        %686 = vmatpush1.bf16.msra.mxu0 %v506
        %687 = vmatprep.subr.bf16.mxu0 0
        %688 = vmatpush1.bf16.msra.mxu0 %v507
        %689 = vmatprep.subr.bf16.mxu0 0
        %690 = vmatpush1.bf16.msra.mxu0 %v508
        %691 = vmatprep.subr.bf16.mxu0 0
        %692 = vmatpush1.bf16.msra.mxu0 %v509
        %693 = vmatprep.subr.bf16.mxu0 0
        %694 = vmatpush1.bf16.msra.mxu0 %v510
        %695 = vmatprep.subr.bf16.mxu0 0
        %696 = vmatpush1.bf16.msra.mxu0 0
        %697 = vmatprep.subr.bf16.mxu0 0
        %698 = vmatpush1.bf16.msra.mxu0 0
        %699 = vmatprep.subr.bf16.mxu0 0
        %700 = vmatpush1.bf16.msra.mxu0 0
        %701 = vmatprep.subr.bf16.mxu0 0
        %702 = vmatpush1.bf16.msra.mxu0 0
        %703 = vmatprep.subr.bf16.mxu0 0
        %704 = vmatpush1.bf16.msra.mxu0 0
        %705 = vmatprep.subr.bf16.mxu0 0
        %706 = vmatpush1.bf16.msra.mxu0 0
        %707 = vmatprep.subr.bf16.mxu0 0
        %708 = vmatpush1.bf16.msra.mxu0 0
        %709 = vmatprep.subr.bf16.mxu0 0
        %710 = vmatpush1.bf16.msra.mxu0 0
        %711 = vmatprep.mubr.bf16.mxu0 0
        %712 = vmatmul.mubr.bf16.gmra.mrb[0].mxu0 %v315
        %v713 = vpop.f32.mrb[0].mxu0
        %v714 = vadd.f32 %v666, %v713
        %v715 = vpop.f32.mrb[0].mxu0
        %v716 = vpop.f32.mrb[0].mxu0
        %v717 = vadd.f32 %v669, %v716
        %v718 = vpop.f32.mrb[0].mxu0
        %719 = vmatprep.mubr.bf16.mxu0 0
        %720 = vmatmul.mubr.bf16.gmra.mrb[0].mxu0 %v318
        %v721 = vpop.f32.mrb[0].mxu0
        %v722 = vadd.f32 %v674, %v721
        %v723 = vpop.f32.mrb[0].mxu0
        %v724 = vpop.f32.mrb[0].mxu0
        %v725 = vpop.f32.mrb[0].mxu0
        %726 = vdwg.mxu0
        %v727 = vld [vmem:[#allocation7] sm:$0xf]
        %v728 = vld [vmem:[#allocation7 + $0x4] sm:$0xf]
        %v729 = vld [vmem:[#allocation7 + $0x8] sm:$0xf]
        %v730 = vld [vmem:[#allocation7 + $0xc] sm:$0xf]
        %v731 = vld [vmem:[#allocation7 + $0x10] sm:$0xf]
        %v732 = vld [vmem:[#allocation7 + $0x14] sm:$0xf]
        %v733 = vld [vmem:[#allocation7 + $0x18] sm:$0xf]
        %v734 = vld [vmem:[#allocation7 + $0x1c] sm:$0xf]
        %v735 = vld [vmem:[#allocation7 + $0x20] sm:$0xf]
        %v736 = vld [vmem:[#allocation7 + $0x24] sm:$0xf]
        %v737 = vld [vmem:[#allocation7 + $0x28] sm:$0xf]
        %v738 = vld [vmem:[#allocation7 + $0x2c] sm:$0xf]
        %v739 = vld [vmem:[#allocation7 + $0x30] sm:$0xf]
        %v740 = vld [vmem:[#allocation7 + $0x34] sm:$0xf]
        %v741 = vld [vmem:[#allocation7 + $0x38] sm:$0xf]
        %v742 = vld [vmem:[#allocation7 + $0x3c] sm:$0xf]
        %v743 = vld [vmem:[#allocation7 + $0x40] sm:$0xf]
        %v744 = vld [vmem:[#allocation7 + $0x44] sm:$0xf]
        %v745 = vld [vmem:[#allocation7 + $0x48] sm:$0xf]
        %v746 = vld [vmem:[#allocation7 + $0x4c] sm:$0xf]
        %v747 = vld [vmem:[#allocation7 + $0x50] sm:$0xf]
        %v748 = vld [vmem:[#allocation7 + $0x54] sm:$0xf]
        %v749 = vld [vmem:[#allocation7 + $0x58] sm:$0xf]
        %v750 = vld [vmem:[#allocation7 + $0x5c] sm:$0xf]
        %v751 = vld [vmem:[#allocation7 + $0x60] sm:$0xf]
        %v752 = vld [vmem:[#allocation7 + $0x64] sm:$0xf]
        %v753 = vld [vmem:[#allocation7 + $0x68] sm:$0xf]
        %v754 = vld [vmem:[#allocation7 + $0x6c] sm:$0xf]
        %v755 = vld [vmem:[#allocation7 + $0x70] sm:$0xf]
        %v756 = vld [vmem:[#allocation7 + $0x74] sm:$0xf]
        %v757 = vld [vmem:[#allocation7 + $0x78] sm:$0xf]
        %v758 = vld [vmem:[#allocation7 + $0x7c] sm:$0xf]
        %v759 = vld [vmem:[#allocation7 + $0x80] sm:$0xf]
        %v760 = vld [vmem:[#allocation7 + $0x84] sm:$0xf]
        %v761 = vld [vmem:[#allocation7 + $0x88] sm:$0xf]
        %v762 = vld [vmem:[#allocation7 + $0x8c] sm:$0xf]
        %v763 = vld [vmem:[#allocation7 + $0x90] sm:$0xf]
        %v764 = vld [vmem:[#allocation7 + $0x94] sm:$0xf]
        %v765 = vld [vmem:[#allocation7 + $0x98] sm:$0xf]
        %v766 = vld [vmem:[#allocation7 + $0x9c] sm:$0xf]
        %v767 = vld [vmem:[#allocation7 + $0xa0] sm:$0xf]
        %v768 = vld [vmem:[#allocation7 + $0xa4] sm:$0xf]
        %v769 = vld [vmem:[#allocation7 + $0xa8] sm:$0xf]
        %v770 = vld [vmem:[#allocation7 + $0xac] sm:$0xf]
        %v771 = vld [vmem:[#allocation7 + $0xb0] sm:$0xf]
        %v772 = vld [vmem:[#allocation7 + $0xb4] sm:$0xf]
        %v773 = vld [vmem:[#allocation7 + $0xb8] sm:$0xf]
        %v774 = vld [vmem:[#allocation7 + $0xbc] sm:$0xf]
        %v823 = vunpack.c.l.b16 %v727
        %v824 = vunpack.c.l.b16 %v728
        %v825 = vunpack.c.l.b16 %v729
        %v826 = vunpack.c.l.b16 %v730
        %v827 = vunpack.c.l.b16 %v731
        %v828 = vunpack.c.l.b16 %v732
        %v829 = vunpack.c.l.b16 %v733
        %v830 = vunpack.c.l.b16 %v734
        %v831 = vunpack.c.l.b16 %v735
        %v832 = vunpack.c.l.b16 %v736
        %v833 = vunpack.c.l.b16 %v737
        %v834 = vunpack.c.l.b16 %v738
        %v835 = vunpack.c.l.b16 %v739
        %v836 = vunpack.c.l.b16 %v740
        %v837 = vunpack.c.l.b16 %v741
        %v838 = vunpack.c.l.b16 %v742
        %v839 = vunpack.c.l.b16 %v743
        %v840 = vunpack.c.l.b16 %v744
        %v841 = vunpack.c.l.b16 %v745
        %v842 = vunpack.c.l.b16 %v746
        %v843 = vunpack.c.l.b16 %v747
        %v844 = vunpack.c.l.b16 %v748
        %v845 = vunpack.c.l.b16 %v749
        %v846 = vunpack.c.l.b16 %v750
        %v847 = vunpack.c.l.b16 %v751
        %v848 = vunpack.c.l.b16 %v752
        %v849 = vunpack.c.l.b16 %v753
        %v850 = vunpack.c.l.b16 %v754
        %v851 = vunpack.c.l.b16 %v755
        %v852 = vunpack.c.l.b16 %v756
        %v853 = vunpack.c.l.b16 %v757
        %v854 = vunpack.c.l.b16 %v758
        %v855 = vunpack.c.l.b16 %v759
        %v856 = vunpack.c.l.b16 %v760
        %v857 = vunpack.c.l.b16 %v761
        %v858 = vunpack.c.l.b16 %v762
        %v859 = vunpack.c.l.b16 %v763
        %v860 = vunpack.c.l.b16 %v764
        %v861 = vunpack.c.l.b16 %v765
        %v862 = vunpack.c.l.b16 %v766
        %v863 = vunpack.c.l.b16 %v767
        %v864 = vunpack.c.l.b16 %v768
        %v865 = vunpack.c.l.b16 %v769
        %v866 = vunpack.c.l.b16 %v770
        %v867 = vunpack.c.l.b16 %v771
        %v868 = vunpack.c.l.b16 %v772
        %v869 = vunpack.c.l.b16 %v773
        %v870 = vunpack.c.l.b16 %v774
        %v871 = vpack.c.b16 %v824, %v823
        %v872 = vpack.c.b16 %v826, %v825
        %v873 = vpack.c.b16 %v828, %v827
        %v874 = vpack.c.b16 %v830, %v829
        %v875 = vpack.c.b16 %v832, %v831
        %v876 = vpack.c.b16 %v834, %v833
        %v877 = vpack.c.b16 %v836, %v835
        %v878 = vpack.c.b16 %v838, %v837
        %v879 = vpack.c.b16 %v840, %v839
        %v880 = vpack.c.b16 %v842, %v841
        %v881 = vpack.c.b16 %v844, %v843
        %v882 = vpack.c.b16 %v846, %v845
        %v883 = vpack.c.b16 %v848, %v847
        %v884 = vpack.c.b16 %v850, %v849
        %v885 = vpack.c.b16 %v852, %v851
        %v886 = vpack.c.b16 %v854, %v853
        %v887 = vpack.c.b16 %v856, %v855
        %v888 = vpack.c.b16 %v858, %v857
        %v889 = vpack.c.b16 %v860, %v859
        %v890 = vpack.c.b16 %v862, %v861
        %v891 = vpack.c.b16 %v864, %v863
        %v892 = vpack.c.b16 %v866, %v865
        %v893 = vpack.c.b16 %v868, %v867
        %v894 = vpack.c.b16 %v870, %v869
        %919 = vmatprep.subr.bf16.mxu0 0
        %920 = vmatpush1.bf16.msra.mxu0 %v871
        %921 = vmatprep.subr.bf16.mxu0 0
        %922 = vmatpush1.bf16.msra.mxu0 %v872
        %923 = vmatprep.subr.bf16.mxu0 0
        %924 = vmatpush1.bf16.msra.mxu0 %v873
        %925 = vmatprep.subr.bf16.mxu0 0
        %926 = vmatpush1.bf16.msra.mxu0 %v874
        %927 = vmatprep.subr.bf16.mxu0 0
        %928 = vmatpush1.bf16.msra.mxu0 %v875
        %929 = vmatprep.subr.bf16.mxu0 0
        %930 = vmatpush1.bf16.msra.mxu0 %v876
        %931 = vmatprep.subr.bf16.mxu0 0
        %932 = vmatpush1.bf16.msra.mxu0 %v877
        %933 = vmatprep.subr.bf16.mxu0 0
        %934 = vmatpush1.bf16.msra.mxu0 %v878
        %935 = vmatprep.subr.bf16.mxu0 0
        %936 = vmatpush1.bf16.msra.mxu0 %v879
        %937 = vmatprep.subr.bf16.mxu0 0
        %938 = vmatpush1.bf16.msra.mxu0 %v880
        %939 = vmatprep.subr.bf16.mxu0 0
        %940 = vmatpush1.bf16.msra.mxu0 %v881
        %941 = vmatprep.subr.bf16.mxu0 0
        %942 = vmatpush1.bf16.msra.mxu0 %v882
        %943 = vmatprep.subr.bf16.mxu0 0
        %944 = vmatpush1.bf16.msra.mxu0 %v883
        %945 = vmatprep.subr.bf16.mxu0 0
        %946 = vmatpush1.bf16.msra.mxu0 %v884
        %947 = vmatprep.subr.bf16.mxu0 0
        %948 = vmatpush1.bf16.msra.mxu0 %v885
        %949 = vmatprep.subr.bf16.mxu0 0
        %950 = vmatpush1.bf16.msra.mxu0 %v886
        %951 = vmatprep.mubr.bf16.mxu0 %v314
        %952 = vmatmul.mubr.bf16.gmra.mrb[0].mxu0 %v313
        %v953 = vpop.f32.mrb[0].mxu0
        %v954 = vadd.f32 0.0, %v953
        %v955 = vpop.f32.mrb[0].mxu0
        %v956 = vpop.f32.mrb[0].mxu0
        %v957 = vadd.f32 0.0, %v956
        %v958 = vpop.f32.mrb[0].mxu0
        %959 = vmatprep.mubr.bf16.mxu0 %v317
        %960 = vmatmul.mubr.bf16.gmra.mrb[0].mxu0 %v316
        %v961 = vpop.f32.mrb[0].mxu0
        %v962 = vadd.f32 0.0, %v961
        %v963 = vpop.f32.mrb[0].mxu0
        %v964 = vpop.f32.mrb[0].mxu0
        %v965 = vpop.f32.mrb[0].mxu0
        %966 = vdwg.mxu0
        %967 = vmatprep.subr.bf16.mxu0 0
        %968 = vmatpush1.bf16.msra.mxu0 %v887
        %969 = vmatprep.subr.bf16.mxu0 0
        %970 = vmatpush1.bf16.msra.mxu0 %v888
        %971 = vmatprep.subr.bf16.mxu0 0
        %972 = vmatpush1.bf16.msra.mxu0 %v889
        %973 = vmatprep.subr.bf16.mxu0 0
        %974 = vmatpush1.bf16.msra.mxu0 %v890
        %975 = vmatprep.subr.bf16.mxu0 0
        %976 = vmatpush1.bf16.msra.mxu0 %v891
        %977 = vmatprep.subr.bf16.mxu0 0
        %978 = vmatpush1.bf16.msra.mxu0 %v892
        %979 = vmatprep.subr.bf16.mxu0 0
        %980 = vmatpush1.bf16.msra.mxu0 %v893
        %981 = vmatprep.subr.bf16.mxu0 0
        %982 = vmatpush1.bf16.msra.mxu0 %v894
        %983 = vmatprep.subr.bf16.mxu0 0
        %984 = vmatpush1.bf16.msra.mxu0 0
        %985 = vmatprep.subr.bf16.mxu0 0
        %986 = vmatpush1.bf16.msra.mxu0 0
        %987 = vmatprep.subr.bf16.mxu0 0
        %988 = vmatpush1.bf16.msra.mxu0 0
        %989 = vmatprep.subr.bf16.mxu0 0
        %990 = vmatpush1.bf16.msra.mxu0 0
        %991 = vmatprep.subr.bf16.mxu0 0
        %992 = vmatpush1.bf16.msra.mxu0 0
        %993 = vmatprep.subr.bf16.mxu0 0
        %994 = vmatpush1.bf16.msra.mxu0 0
        %995 = vmatprep.subr.bf16.mxu0 0
        %996 = vmatpush1.bf16.msra.mxu0 0
        %997 = vmatprep.subr.bf16.mxu0 0
        %998 = vmatpush1.bf16.msra.mxu0 0
        %999 = vmatprep.mubr.bf16.mxu0 0
        %1000 = vmatmul.mubr.bf16.gmra.mrb[0].mxu0 %v315
        %v1001 = vpop.f32.mrb[0].mxu0
        %v1002 = vadd.f32 %v954, %v1001
        %v1003 = vpop.f32.mrb[0].mxu0
        %v1004 = vpop.f32.mrb[0].mxu0
        %v1005 = vadd.f32 %v957, %v1004
        %v1006 = vpop.f32.mrb[0].mxu0
        %1007 = vmatprep.mubr.bf16.mxu0 0
        %1008 = vmatmul.mubr.bf16.gmra.mrb[0].mxu0 %v318
        %v1009 = vpop.f32.mrb[0].mxu0
        %v1010 = vadd.f32 %v962, %v1009
        %v1011 = vpop.f32.mrb[0].mxu0
        %v1012 = vpop.f32.mrb[0].mxu0
        %v1013 = vpop.f32.mrb[0].mxu0
        %1014 = vdwg.mxu0
        %v1015 = vadd.f32 %v714, %v1002
        %v1016 = vadd.f32 %v717, %v1005
        %v1017 = vadd.f32 %v722, %v1010
        %v1018 = vpack.c.bf16 %v1016, %v1015
        %v1019 = vpack.c.bf16 %v1017, %v1017
        %v1020 = vunpack.c.l.bf16 %v1018
        %v1021 = vunpack.c.h.bf16 %v1018
        %v1022 = vunpack.c.l.bf16 %v1019
        %v1023 = vsub.f32 %v1015, %v1020
        %v1024 = vsub.f32 %v1016, %v1021
        %v1025 = vsub.f32 %v1017, %v1022
        %v1026 = vpack.c.bf16 %v1024, %v1023
        %v1027 = vpack.c.bf16 %v1025, %v1025
        %v1028 = vld [vmem:[%s3] sm:$0xf]
        %vm1029 = vcmask 195584
        %v1031 = vsel %vm1029, %v1028, 0
        %vm1033 = vcmask 1043456
        %v1035 = vsel %vm1033, %v1027, 0
        %1037 = vmatprep.subr.bf16.mxu0 0
        %1038 = vmatpush1.bf16.msra.mxu0 %v1026
        %1039 = vmatprep.subr.bf16.mxu0 0
        %1040 = vmatpush1.bf16.msra.mxu0 %v1035
        %1041 = vmatprep.subr.bf16.mxu0 0
        %1042 = vmatpush1.bf16.msra.mxu0 0
        %1043 = vmatprep.subr.bf16.mxu0 0
        %1044 = vmatpush1.bf16.msra.mxu0 0
        %1045 = vmatprep.subr.bf16.mxu0 0
        %1046 = vmatpush1.bf16.msra.mxu0 0
        %1047 = vmatprep.subr.bf16.mxu0 0
        %1048 = vmatpush1.bf16.msra.mxu0 0
        %1049 = vmatprep.subr.bf16.mxu0 0
        %1050 = vmatpush1.bf16.msra.mxu0 0
        %1051 = vmatprep.subr.bf16.mxu0 0
        %1052 = vmatpush1.bf16.msra.mxu0 0
        %1053 = vmatprep.subr.bf16.mxu0 0
        %1054 = vmatpush1.bf16.msra.mxu0 0
        %1055 = vmatprep.subr.bf16.mxu0 0
        %1056 = vmatpush1.bf16.msra.mxu0 0
        %1057 = vmatprep.subr.bf16.mxu0 0
        %1058 = vmatpush1.bf16.msra.mxu0 0
        %1059 = vmatprep.subr.bf16.mxu0 0
        %1060 = vmatpush1.bf16.msra.mxu0 0
        %1061 = vmatprep.subr.bf16.mxu0 0
        %1062 = vmatpush1.bf16.msra.mxu0 0
        %1063 = vmatprep.subr.bf16.mxu0 0
        %1064 = vmatpush1.bf16.msra.mxu0 0
        %1065 = vmatprep.subr.bf16.mxu0 0
        %1066 = vmatpush1.bf16.msra.mxu0 0
        %1067 = vmatprep.subr.bf16.mxu0 0
        %1068 = vmatpush1.bf16.msra.mxu0 0
        %1069 = vmatprep.mubr.bf16.mxu0 0
        %1070 = vmatmul.mubr.bf16.gmra.mrb[0].mxu0 %v1031
        %v1071 = vpop.f32.mrb[0].mxu0
        %v1072 = vadd.f32 0.0, %v1071
        %v1073 = vpop.f32.mrb[0].mxu0
        %v1074 = vpop.f32.mrb[0].mxu0
        %v1075 = vpop.f32.mrb[0].mxu0
        %1076 = vdwg.mxu0
        %v1078 = vsel %vm1033, %v1019, 0
        %1080 = vmatprep.subr.bf16.mxu0 0
        %1081 = vmatpush1.bf16.msra.mxu0 %v1018
        %1082 = vmatprep.subr.bf16.mxu0 0
        %1083 = vmatpush1.bf16.msra.mxu0 %v1078
        %1084 = vmatprep.subr.bf16.mxu0 0
        %1085 = vmatpush1.bf16.msra.mxu0 0
        %1086 = vmatprep.subr.bf16.mxu0 0
        %1087 = vmatpush1.bf16.msra.mxu0 0
        %1088 = vmatprep.subr.bf16.mxu0 0
        %1089 = vmatpush1.bf16.msra.mxu0 0
        %1090 = vmatprep.subr.bf16.mxu0 0
        %1091 = vmatpush1.bf16.msra.mxu0 0
        %1092 = vmatprep.subr.bf16.mxu0 0
        %1093 = vmatpush1.bf16.msra.mxu0 0
        %1094 = vmatprep.subr.bf16.mxu0 0
        %1095 = vmatpush1.bf16.msra.mxu0 0
        %1096 = vmatprep.subr.bf16.mxu0 0
        %1097 = vmatpush1.bf16.msra.mxu0 0
        %1098 = vmatprep.subr.bf16.mxu0 0
        %1099 = vmatpush1.bf16.msra.mxu0 0
        %1100 = vmatprep.subr.bf16.mxu0 0
        %1101 = vmatpush1.bf16.msra.mxu0 0
        %1102 = vmatprep.subr.bf16.mxu0 0
        %1103 = vmatpush1.bf16.msra.mxu0 0
        %1104 = vmatprep.subr.bf16.mxu0 0
        %1105 = vmatpush1.bf16.msra.mxu0 0
        %1106 = vmatprep.subr.bf16.mxu0 0
        %1107 = vmatpush1.bf16.msra.mxu0 0
        %1108 = vmatprep.subr.bf16.mxu0 0
        %1109 = vmatpush1.bf16.msra.mxu0 0
        %1110 = vmatprep.subr.bf16.mxu0 0
        %1111 = vmatpush1.bf16.msra.mxu0 0
        %1112 = vmatprep.mubr.bf16.mxu0 0
        %1113 = vmatmul.mubr.bf16.gmra.mrb[0].mxu0 %v1031
        %v1114 = vpop.f32.mrb[0].mxu0
        %v1115 = vadd.f32 %v1072, %v1114
        %v1116 = vpop.f32.mrb[0].mxu0
        %v1117 = vpop.f32.mrb[0].mxu0
        %v1118 = vpop.f32.mrb[0].mxu0
        %1119 = vdwg.mxu0
        %v1120 = vld [vmem:[%s4] sm:$0xf]
        %v1122 = vsel %vm1029, %v1120, 0
        %1124 = vmatprep.subr.bf16.mxu0 0
        %1125 = vmatpush1.bf16.msra.mxu0 %v1018
        %1126 = vmatprep.subr.bf16.mxu0 0
        %1127 = vmatpush1.bf16.msra.mxu0 %v1078
        %1128 = vmatprep.subr.bf16.mxu0 0
        %1129 = vmatpush1.bf16.msra.mxu0 0
        %1130 = vmatprep.subr.bf16.mxu0 0
        %1131 = vmatpush1.bf16.msra.mxu0 0
        %1132 = vmatprep.subr.bf16.mxu0 0
        %1133 = vmatpush1.bf16.msra.mxu0 0
        %1134 = vmatprep.subr.bf16.mxu0 0
        %1135 = vmatpush1.bf16.msra.mxu0 0
        %1136 = vmatprep.subr.bf16.mxu0 0
        %1137 = vmatpush1.bf16.msra.mxu0 0
        %1138 = vmatprep.subr.bf16.mxu0 0
        %1139 = vmatpush1.bf16.msra.mxu0 0
        %1140 = vmatprep.subr.bf16.mxu0 0
        %1141 = vmatpush1.bf16.msra.mxu0 0
        %1142 = vmatprep.subr.bf16.mxu0 0
        %1143 = vmatpush1.bf16.msra.mxu0 0
        %1144 = vmatprep.subr.bf16.mxu0 0
        %1145 = vmatpush1.bf16.msra.mxu0 0
        %1146 = vmatprep.subr.bf16.mxu0 0
        %1147 = vmatpush1.bf16.msra.mxu0 0
        %1148 = vmatprep.subr.bf16.mxu0 0
        %1149 = vmatpush1.bf16.msra.mxu0 0
        %1150 = vmatprep.subr.bf16.mxu0 0
        %1151 = vmatpush1.bf16.msra.mxu0 0
        %1152 = vmatprep.subr.bf16.mxu0 0
        %1153 = vmatpush1.bf16.msra.mxu0 0
        %1154 = vmatprep.subr.bf16.mxu0 0
        %1155 = vmatpush1.bf16.msra.mxu0 0
        %1156 = vmatprep.mubr.bf16.mxu0 0
        %1157 = vmatmul.mubr.bf16.gmra.mrb[0].mxu0 %v1122
        %v1158 = vpop.f32.mrb[0].mxu0
        %v1159 = vadd.f32 0.0, %v1158
        %v1160 = vpop.f32.mrb[0].mxu0
        %v1161 = vpop.f32.mrb[0].mxu0
        %v1162 = vpop.f32.mrb[0].mxu0
        %1163 = vdwg.mxu0
        %v1164 = vadd.f32 %v1115, %v1159
        %1165 = vst [vmem:[%s229] sm:$0xff] %v1164
        %s1166 = sand.u32 %s136, 1
        %s1167 = scalar_lea.sflag [#allocation6], %s1166
        %s1168 = sand.u32 %s136, 1
        %s1169 = smul.addr %s1168, 8
        %s1170 = scalar_lea.vmem [#allocation9], %s1169
        // Predicated region
        $region61: #{tpu_custom_call.1} parent=35 // pred_check
          %p1171 = pneg %p146
        $region62: #{tpu_custom_call.1} parent=35 // pred_check_branch
          %1173 = sbr.rel (%p1171) target = $region64
        $region63: #{tpu_custom_call.1} parent=35 // pred_region
          %s1175 = ssub.s32 128, 128
          %1176 = vsyncadd %s1167, %s1175
          %s1177 = sadd.s32 %s28, %s27
          %s1178 = sadd.s32 %s1177, %s26
          %s1179 = smul.addr %s1178, 128
          %s1180 = scalar_lea.hbm %s5, %s1179
          %s1182 = sshll.u32 %s1170, 4
          %s1183 = int_to_ptr.vmem [resolvable:$true] %s1182
          %1185 = dma.vmem_to_hbm [thread:$0]  %s1183, 128, %s1180, %s1167
        $region64: #{tpu_custom_call.1} parent=35 // pred_fallthru
          _
      $region36: #{tpu_custom_call.1} parent=5 // pred_fallthru
        _
      %p1186 = scmp.le.s32.totalorder 2, %s16
      // Predicated region
      $region65: #{tpu_custom_call.1} parent=5 // pred_check
        %p1187 = pneg %p1186
      $region66: #{tpu_custom_call.1} parent=5 // pred_check_branch
        %1189 = sbr.rel (%p1187) target = $region68
      $region67: #{tpu_custom_call.1} parent=5 // pred_region
        %s1190 = ssub.s32 %s16, 2
        // Predicated region
        $region69: #{tpu_custom_call.1} parent=67 // pred_check
          %p1191 = pneg %p152
        $region70: #{tpu_custom_call.1} parent=67 // pred_check_branch
          %1193 = sbr.rel (%p1191) target = $region72
        $region71: #{tpu_custom_call.1} parent=67 // pred_region
          %s1194 = sand.u32 %s137, 1
          %s1195 = scalar_lea.sflag [#allocation6], %s1194
          %s1196 = sand.u32 %s137, 1
          %s1197 = smul.addr %s1196, 8
          %s1198 = scalar_lea.vmem [#allocation9], %s1197
          %1199 = dma.done %s1195, 128
        $region72: #{tpu_custom_call.1} parent=67 // pred_fallthru
          _
      $region68: #{tpu_custom_call.1} parent=5 // pred_fallthru
        _
    $region6: #{tpu_custom_call.1} parent=1 // loop_footer
      %s20 = sadd.s32 1, %s16
    $region7: #{tpu_custom_call.1} parent=1 // loop_footer_branch
      %15 = sbr.rel target = $region3
    $region8: #{tpu_custom_call.1} parent=1 // loop_exit
      _
    %1200 = vsyncpa [#allocation5], 1
    %s1201 = scalar_lea.sflag [#allocation5], 1
    %1202 = vsyncpa %s1201, 1
    %1203 = vsyncpa [#allocation8], 1
    %1204 = vsyncpa [#allocation6], 1
    %s1205 = scalar_lea.sflag [#allocation6], 1
    %1206 = vsyncpa %s1205, 1
  %1207 = vsyncmov [#allocation3]
  %s1208 = vpop.sfrf %1207
  %p1209 = scmp.eq.s32.totalorder %s1208, 0
  %p1210 = pneg %p1209
  %1212 = shalt.err (%p1210)
  %s1213 = scalar_lea.sflag [#allocation3], 1
  %1214 = vsyncmov %s1213
  %s1215 = vpop.sfrf %1214
  %p1216 = scmp.eq.s32.totalorder %s1215, 0
  %p1217 = pneg %p1216
  %1219 = shalt.err (%p1217)

</llo_original>
